<compile_context>
chip_gen: v7x
topology: tpu7x:2x2x1
jax: 0.10.0
libtpu: 0.0.40
codegen_flags: <defaults>
</compile_context>

<pallas_src>
import functools

import jax
import jax.numpy as jnp
import numpy as np
from jax.experimental import pallas as pl
from jax.experimental.pallas import tpu as pltpu


def _swpatch_mlp_kernel(num_views, stride, *refs):
    """refs = (view_0, ..., view_{K-1}, w1, b1, w2, b2, out)."""
    x_refs = refs[:num_views]
    w1_ref, b1_ref, w2_ref, b2_ref, out_ref = refs[num_views:]

    # ---- first Linear, expressed as K strided-slab matmuls (this IS the unfold) ----
    # K is tiny & static, so a Python loop unrolls into straight-line MXU pushes.
    acc = None
    for k in range(num_views):
        xk = x_refs[k][0, :, :]                              # (TILE_N, stride)
        wk = w1_ref[k * stride:(k + 1) * stride, :]          # (stride, d_model), sublane-aligned
        part = jnp.dot(xk, wk, preferred_element_type=jnp.float32)
        acc = part if acc is None else acc + part
    h = jnp.maximum(acc + b1_ref[...], 0.0)                  # f32 VPU path (v5e-safe)

    # ---- second Linear (d_model x d_model, dominates FLOPs) ----
    o = jnp.dot(h.astype(w2_ref.dtype), w2_ref[...],
                preferred_element_type=jnp.float32) + b2_ref[...]
    out_ref[0, :, :] = o.astype(out_ref.dtype)


def sw_patch_encoder(x, w1, b1, w2, b2, *, patch_len=16, stride=8, pad=True,
                     compute_dtype=jnp.bfloat16, tile_n=1024):
    """x: (B, C, T) float32. Returns (B, N, d_model) float32."""
    B, C, T = x.shape
    patch_dim = patch_len * C
    d_model = w1.shape[1]

    # glue: Rearrange 'b c t -> b (c t)'  +  ConstantPad1d((0, stride), 0)
    x_flat = x.reshape(B, C * T)
    if pad:
        x_flat = jnp.pad(x_flat, ((0, 0), (0, stride)))
    L = x_flat.shape[-1]
    # NOTE: like torch.unfold, a trailing partial window is silently dropped
    # when (L - patch_dim) is not a multiple of stride (e.g. pad=False cases).
    num_patches = (L - patch_dim) // stride + 1

    # Decompose each window into K chunks of size `stride`; zero-pad w1 rows so
    # the decomposition is exact even when patch_dim % stride != 0.
    K = -(-patch_dim // stride)
    kdim = K * stride
    w1p = jnp.pad(w1, ((0, kdim - patch_dim), (0, 0)))

    # Row tiling over patches (budget well under scoped VMEM even on v7x:
    # per step ~2 * TILE_N * d_model * 4B output + tiny inputs/weights).
    TILE_N = tile_n if num_patches >= tile_n else ((num_patches + 7) // 8) * 8
    NB = -(-num_patches // TILE_N)
    n_pad = NB * TILE_N

    # Chunked input: need n_pad + K - 1 chunks of `stride` elements each.
    chunks_needed = n_pad + K - 1
    L_needed = chunks_needed * stride
    if L_needed >= L:
        x_flat = jnp.pad(x_flat, ((0, 0), (0, L_needed - L)))
    else:
        x_flat = x_flat[:, :L_needed]          # never drops data a patch uses
    x_chunks = x_flat.astype(compute_dtype).reshape(B, chunks_needed, stride)
    # K shifted, block-aligned views; the in-kernel accumulation over them
    # replaces the explicit unfold (no scratch, no masked 1-row stores).
    views = [x_chunks[:, k:k + n_pad, :] for k in range(K)]

    w1c = w1p.astype(compute_dtype)
    w2c = w2.astype(compute_dtype)
    b1r = b1.reshape(1, d_model).astype(jnp.float32)
    b2r = b2.reshape(1, d_model).astype(jnp.float32)

    kernel = functools.partial(_swpatch_mlp_kernel, K, stride)
    view_spec = pl.BlockSpec((1, TILE_N, stride), lambda b, j: (b, j, 0))
    out = pl.pallas_call(
        kernel,
        out_shape=jax.ShapeDtypeStruct((B, n_pad, d_model), jnp.float32),
        grid_spec=pltpu.PrefetchScalarGridSpec(
            num_scalar_prefetch=0,
            grid=(B, NB),
            in_specs=[view_spec] * K + [
                pl.BlockSpec((kdim, d_model), lambda b, j: (0, 0)),
                pl.BlockSpec((1, d_model), lambda b, j: (0, 0)),
                pl.BlockSpec((d_model, d_model), lambda b, j: (0, 0)),
                pl.BlockSpec((1, d_model), lambda b, j: (0, 0)),
            ],
            out_specs=pl.BlockSpec((1, TILE_N, d_model),
                                   lambda b, j: (b, j, 0)),
        ),
        compiler_params=pltpu.CompilerParams(
            dimension_semantics=("parallel", "parallel"),
            vmem_limit_bytes=32 * 1024 * 1024),
    )(*views, w1c, b1r, w2c, b2r)
    return out[:, :num_patches, :]


def _reference(x, w1, b1, w2, b2, *, patch_len=16, stride=8):
    """Pure numpy reference mirroring the PyTorch forward."""
    x = np.asarray(x, dtype=np.float32)
    B, C, T = x.shape
    patch_dim = patch_len * C
    xf = x.reshape(B, C * T)
    xf = np.pad(xf, ((0, 0), (0, stride)))
    L = xf.shape[-1]
    n = (L - patch_dim) // stride + 1
    idx = np.arange(n)[:, None] * stride + np.arange(patch_dim)[None, :]
    patches = xf[:, idx]                                   # (B, N, patch_dim)
    h = np.maximum(patches @ np.asarray(w1) + np.asarray(b1), 0.0)
    return h @ np.asarray(w2) + np.asarray(b2)


if __name__ == "__main__":
    # Module defaults: patch_len=16, stride=8, in_channel=1, d_model=128.
    # x: (B=2, C=1, T=64) -> 8 patches per batch element.
    patch_len, stride, in_channel, d_model = 16, 8, 1, 128
    patch_dim = patch_len * in_channel
    B, T = 2, 64

    key = jax.random.PRNGKey(0)
    kx, kw1, kb1, kw2, kb2 = jax.random.split(key, 5)
    x = jax.random.normal(kx, (B, in_channel, T), dtype=jnp.float32)
    # deterministic synthetic parameters (nn.Linear shapes, x @ W + b layout)
    w1 = 0.1 * jax.random.normal(kw1, (patch_dim, d_model), dtype=jnp.float32)
    b1 = 0.1 * jax.random.normal(kb1, (d_model,), dtype=jnp.float32)
    w2 = 0.1 * jax.random.normal(kw2, (d_model, d_model), dtype=jnp.float32)
    b2 = 0.1 * jax.random.normal(kb2, (d_model,), dtype=jnp.float32)

    out = sw_patch_encoder(x, w1, b1, w2, b2,
                           patch_len=patch_len, stride=stride, pad=True)
    out = jax.block_until_ready(out)

    ref = _reference(x, w1, b1, w2, b2, patch_len=patch_len, stride=stride)
    assert out.shape == ref.shape, (out.shape, ref.shape)
    np.testing.assert_allclose(np.asarray(out), ref, rtol=2e-2, atol=2e-2)
    print("KERNEL_OK")
</pallas_src>

<mosaic_0001>
module attributes {stable_mosaic.version = 11 : i64} {
  func.func @_swpatch_mlp_kernel(%arg0: i32, %arg1: i32, %arg2: memref<1x8x8xbf16, #tpu.memory_space<vmem>>, %arg3: memref<1x8x8xbf16, #tpu.memory_space<vmem>>, %arg4: memref<16x128xbf16, #tpu.memory_space<vmem>>, %arg5: memref<1x128xf32, #tpu.memory_space<vmem>>, %arg6: memref<128x128xbf16, #tpu.memory_space<vmem>>, %arg7: memref<1x128xf32, #tpu.memory_space<vmem>>, %arg8: memref<1x8x128xf32, #tpu.memory_space<vmem>>) attributes {dimension_semantics = [#tpu.dimension_semantics<parallel>, #tpu.dimension_semantics<parallel>], iteration_bounds = array<i64: 2, 1>, scalar_prefetch = 0 : i64, scratch_operands = 0 : i64, tpu.core_type = #tpu.core_type<tc>, window_params = [{transform_indices = @transform_0, window_bounds = array<i64: 1, 8, 8>}, {transform_indices = @transform_1, window_bounds = array<i64: 1, 8, 8>}, {pipeline_mode = #tpu.pipeline_mode<synchronous>, transform_indices = @transform_2, window_bounds = array<i64: 16, 128>}, {pipeline_mode = #tpu.pipeline_mode<synchronous>, transform_indices = @transform_3, window_bounds = array<i64: 1, 128>}, {pipeline_mode = #tpu.pipeline_mode<synchronous>, transform_indices = @transform_4, window_bounds = array<i64: 128, 128>}, {pipeline_mode = #tpu.pipeline_mode<synchronous>, transform_indices = @transform_5, window_bounds = array<i64: 1, 128>}, {transform_indices = @transform_6, window_bounds = array<i64: 1, 8, 128>}]} {
    %c0 = arith.constant 0 : index
    %c0_0 = arith.constant 0 : index
    %c0_1 = arith.constant 0 : index
    %0 = vector.load %arg2[%c0, %c0_0, %c0_1] : memref<1x8x8xbf16, #tpu.memory_space<vmem>>, vector<1x8x8xbf16>
    %1 = vector.shape_cast %0 : vector<1x8x8xbf16> to vector<8x8xbf16>
    %c0_2 = arith.constant 0 : index
    %c0_3 = arith.constant 0 : index
    %2 = vector.load %arg4[%c0_2, %c0_3] : memref<16x128xbf16, #tpu.memory_space<vmem>>, vector<8x128xbf16>
    %cst = arith.constant dense<0.000000e+00> : vector<8x128xf32>
    %3 = tpu.matmul %1, %2, %cst {dimension_numbers = #tpu.dot_dimension_numbers<[1], [0], [0], [1], [0, 0, 1, 1], [], []>} : vector<8x8xbf16>, vector<8x128xbf16>, vector<8x128xf32> -> vector<8x128xf32>
    %c0_4 = arith.constant 0 : index
    %c0_5 = arith.constant 0 : index
    %c0_6 = arith.constant 0 : index
    %4 = vector.load %arg3[%c0_4, %c0_5, %c0_6] : memref<1x8x8xbf16, #tpu.memory_space<vmem>>, vector<1x8x8xbf16>
    %5 = vector.shape_cast %4 : vector<1x8x8xbf16> to vector<8x8xbf16>
    %c8 = arith.constant 8 : index
    %c0_7 = arith.constant 0 : index
    %6 = vector.load %arg4[%c8, %c0_7] : memref<16x128xbf16, #tpu.memory_space<vmem>>, vector<8x128xbf16>
    %cst_8 = arith.constant dense<0.000000e+00> : vector<8x128xf32>
    %7 = tpu.matmul %5, %6, %cst_8 {dimension_numbers = #tpu.dot_dimension_numbers<[1], [0], [0], [1], [0, 0, 1, 1], [], []>} : vector<8x8xbf16>, vector<8x128xbf16>, vector<8x128xf32> -> vector<8x128xf32>
    %8 = arith.addf %3, %7 : vector<8x128xf32>
    %c0_9 = arith.constant 0 : index
    %c0_10 = arith.constant 0 : index
    %9 = vector.load %arg5[%c0_9, %c0_10] : memref<1x128xf32, #tpu.memory_space<vmem>>, vector<1x128xf32>
    %10 = vector.broadcast %9 : vector<1x128xf32> to vector<8x128xf32>
    %11 = arith.addf %8, %10 : vector<8x128xf32>
    %cst_11 = arith.constant 0.000000e+00 : f32
    %12 = vector.broadcast %cst_11 : f32 to vector<8x128xf32>
    %13 = arith.maximumf %11, %12 : vector<8x128xf32>
    %14 = arith.truncf %13 : vector<8x128xf32> to vector<8x128xbf16>
    %c0_12 = arith.constant 0 : index
    %c0_13 = arith.constant 0 : index
    %15 = vector.load %arg6[%c0_12, %c0_13] : memref<128x128xbf16, #tpu.memory_space<vmem>>, vector<128x128xbf16>
    %cst_14 = arith.constant dense<0.000000e+00> : vector<8x128xf32>
    %16 = tpu.matmul %14, %15, %cst_14 {dimension_numbers = #tpu.dot_dimension_numbers<[1], [0], [0], [1], [0, 0, 1, 1], [], []>} : vector<8x128xbf16>, vector<128x128xbf16>, vector<8x128xf32> -> vector<8x128xf32>
    %c0_15 = arith.constant 0 : index
    %c0_16 = arith.constant 0 : index
    %17 = vector.load %arg7[%c0_15, %c0_16] : memref<1x128xf32, #tpu.memory_space<vmem>>, vector<1x128xf32>
    %18 = vector.broadcast %17 : vector<1x128xf32> to vector<8x128xf32>
    %19 = arith.addf %16, %18 : vector<8x128xf32>
    %c0_17 = arith.constant 0 : index
    %c0_18 = arith.constant 0 : index
    %c0_19 = arith.constant 0 : index
    %20 = vector.load %arg8[%c0_17, %c0_18, %c0_19] : memref<1x8x128xf32, #tpu.memory_space<vmem>>, vector<1x8x128xf32>
    %21 = vector.shape_cast %20 : vector<1x8x128xf32> to vector<8x128xf32>
    %22 = vector.shape_cast %19 : vector<8x128xf32> to vector<1x8x128xf32>
    tpu.vector_store %arg8[%c0_17, %c0_18, %c0_19], %22 {strides = array<i32>} : memref<1x8x128xf32, #tpu.memory_space<vmem>>, vector<1x8x128xf32>,
    return
  }
  func.func @transform_0(%arg0: i32, %arg1: i32) -> (i32, i32, i32) {
    %c0_i32 = arith.constant 0 : i32
    %c0_i32_0 = arith.constant 0 : i32
    return %arg0, %arg1, %c0_i32 : i32, i32, i32
  }
  func.func @transform_1(%arg0: i32, %arg1: i32) -> (i32, i32, i32) {
    %c0_i32 = arith.constant 0 : i32
    %c0_i32_0 = arith.constant 0 : i32
    return %arg0, %arg1, %c0_i32 : i32, i32, i32
  }
  func.func @transform_2(%arg0: i32, %arg1: i32) -> (i32, i32) {
    %c0_i32 = arith.constant 0 : i32
    %c0_i32_0 = arith.constant 0 : i32
    %c0_i32_1 = arith.constant 0 : i32
    return %c0_i32, %c0_i32_0 : i32, i32
  }
  func.func @transform_3(%arg0: i32, %arg1: i32) -> (i32, i32) {
    %c0_i32 = arith.constant 0 : i32
    %c0_i32_0 = arith.constant 0 : i32
    %c0_i32_1 = arith.constant 0 : i32
    return %c0_i32, %c0_i32_0 : i32, i32
  }
  func.func @transform_4(%arg0: i32, %arg1: i32) -> (i32, i32) {
    %c0_i32 = arith.constant 0 : i32
    %c0_i32_0 = arith.constant 0 : i32
    %c0_i32_1 = arith.constant 0 : i32
    return %c0_i32, %c0_i32_0 : i32, i32
  }
  func.func @transform_5(%arg0: i32, %arg1: i32) -> (i32, i32) {
    %c0_i32 = arith.constant 0 : i32
    %c0_i32_0 = arith.constant 0 : i32
    %c0_i32_1 = arith.constant 0 : i32
    return %c0_i32, %c0_i32_0 : i32, i32
  }
  func.func @transform_6(%arg0: i32, %arg1: i32) -> (i32, i32, i32) {
    %c0_i32 = arith.constant 0 : i32
    %c0_i32_0 = arith.constant 0 : i32
    return %arg0, %arg1, %c0_i32 : i32, i32, i32
  }
}

</mosaic_0001>

<llo_original>
// kernel: tpu_custom_call.1
$region0: #{tpu_custom_call.1}
  #allocation0 [shape = 'u32[]', space=smem, size = 0x4, offset = 0x4, fixed_abs, tag = 'smem constant byte address 0x4 - core index']
  #allocation1 [shape = 'u32[144,128]{1,0:T(1,128)}', space=vmem, size = 0x12000, scoped, tag = 'internal scratch']
  %s0 = inlined_call_operand.hbm [shape: bf16[2,8,8], index: 0, kind: input, shape index: {}]
  %s1 = inlined_call_operand.hbm [shape: bf16[2,8,8], index: 1, kind: input, shape index: {}]
  %s2 = inlined_call_operand.hbm [shape: bf16[16,128], index: 2, kind: input, shape index: {}]
  %s3 = inlined_call_operand.vmem [shape: f32[1,128], index: 3, kind: input, shape index: {}]
  %s4 = inlined_call_operand.hbm [shape: bf16[128,128], index: 4, kind: input, shape index: {}]
  %s5 = inlined_call_operand.vmem [shape: f32[1,128], index: 5, kind: input, shape index: {}]
  %s6 = inlined_call_operand.hbm [shape: f32[2,8,128], index: 6, kind: output, shape index: {}]
  %s7 = sld [smem:[#allocation0]]
  $region73: #{tpu_custom_call.1} parent=0
    _
  %s9 = ssub.s32 1, %s7
  %s10 = scalar_select 0, %s9, %s7
  $region1: #{tpu_custom_call.1} parent=0
    #allocation2 [shape = 'u8[4096]{0}', space=vmem, size = 0x1000, scoped, tag = 'input window, operand 0']
    #allocation3 [shape = 's32[2]{0}', space=sflag, size = 0x8, scoped, tag = 'scoped memory for tpu_custom_call.1']
    #allocation4 [shape = 's32[2]{0}', space=sflag, size = 0x8, scoped, tag = 'scoped memory for tpu_custom_call.1']
    #allocation5 [shape = 'u8[4096]{0}', space=vmem, size = 0x1000, scoped, tag = 'input window, operand 1']
    #allocation6 [shape = 's32[2]{0}', space=sflag, size = 0x8, scoped, tag = 'scoped memory for tpu_custom_call.1']
    #allocation7 [shape = 'u8[4096]{0}', space=vmem, size = 0x1000, scoped, tag = 'input window, operand 2, single buffered']
    #allocation8 [shape = 'u8[32768]{0}', space=vmem, size = 0x8000, scoped, tag = 'input window, operand 4, single buffered']
    #allocation9 [shape = 's32[1]{0}', space=sflag, size = 0x4, scoped, tag = 'scoped memory for tpu_custom_call.1']
    #allocation10 [shape = 'u8[8192]{0}', space=vmem, size = 0x2000, scoped, tag = 'output window, operand 0']
    %11 = vsyncpa [#allocation3], 0
    %s12 = scalar_lea.sflag [#allocation3], 1
    %13 = vsyncpa %s12, 0
    %14 = vsyncpa [#allocation6], 0
    %s15 = scalar_lea.sflag [#allocation6], 1
    %16 = vsyncpa %s15, 0
    %17 = vsyncpa [#allocation9], 0
    %18 = vsyncpa [#allocation4], 0
    %s19 = scalar_lea.sflag [#allocation4], 1
    %20 = vsyncpa %s19, 0
    loop: start=0, step=1, limit=4
    $region2: #{tpu_custom_call.1} parent=1 // loop_pre_header
      _
    $region3: #{tpu_custom_call.1} parent=1 // loop_header
      %s22 = sphi 0, %s26
      %p23 = scmp.ge.s32.totalorder %s22, 4
      %s29 = sphi 0, %s41
      %s30 = sphi 0, %s37
      %s31 = sphi 0, %s29
      %s32 = sphi 0, %s30
      %s33 = sphi 0, %s31
      %s34 = sphi 0, %s32
      %s46 = sphi 0, %s48
      %s49 = sphi 0, %s46
      %s50 = sphi 0, %s49
      %s66 = sphi 0, %s50
      %s74 = sphi 0, %s76
      %s77 = sphi 0, %s74
      %s78 = sphi 0, %s77
      %s94 = sphi 0, %s78
      %s98 = sphi 0, %s98
      %s100 = sphi 0, %s98
      %s101 = sphi 0, %s100
      %s115 = sphi 0, %s101
      %s119 = sphi 0, %s119
      %s121 = sphi 0, %s119
      %s122 = sphi 0, %s121
      %s136 = sphi 0, %s122
      %s140 = sphi 0, %s140
      %s142 = sphi 0, %s140
      %s143 = sphi 0, %s142
      %s157 = sphi 0, %s143
      %s161 = sphi 0, %s161
      %s163 = sphi 0, %s161
      %s164 = sphi 0, %s163
      %s178 = sphi 0, %s164
      %s186 = sphi 0, %s188
      %s189 = sphi 0, %s186
      %s190 = sphi 0, %s189
      %s206 = sphi 0, %s190
    $region4: #{tpu_custom_call.1} parent=1 // loop_header_branch
      %25 = sbr.rel (%p23) target = $region8
    $region5: #{tpu_custom_call.1} parent=1 // loop_body
      %s27 = ssub.s32 %s22, 1
      %s28 = ssub.s32 %s22, 2
      %s35 = sadd.s32 1, %s30
      %p36 = scmp.ge.s32.totalorder %s35, 1
      %s37 = scalar_select %p36, 0, %s35
      %s38 = sadd.s32 1, %s29
      %s39 = scalar_select %p36, %s38, %s29
      %p40 = scmp.ge.s32.totalorder %s39, 2
      %s41 = scalar_select %p40, 0, %s39
      %s42 = ssub.s32 %s29, %s41
      %s43 = ssub.s32 %s30, %s37
      %s44 = sor.u32 %s42, %s43
      %p45 = scmp.eq.s32.totalorder %s44, 0
      %s47 = sadd.s32 %s46, 1
      %s48 = scalar_select %p45, %s46, %s47
      %p51 = pneg %p45
      %p52 = scmp.eq.s32.totalorder %s22, 1
      %p53 = por %p51, %p52
      %p54 = scmp.ne.s32.totalorder %s46, %s49
      %p55 = scmp.eq.s32.totalorder %s22, 0
      %p56 = por %p54, %p55
      %p57 = scmp.ne.s32.totalorder %s46, %s49
      %p58 = scmp.eq.s32.totalorder %s27, 1
      %p59 = por %p57, %p58
      %p60 = scmp.ne.s32.totalorder %s49, %s50
      %p61 = scmp.eq.s32.totalorder %s27, 0
      %p62 = por %p60, %p61
      %p63 = scmp.ne.s32.totalorder %s49, %s50
      %p64 = scmp.eq.s32.totalorder %s28, 1
      %p65 = por %p63, %p64
      %p67 = scmp.ne.s32.totalorder %s50, %s66
      %p68 = scmp.eq.s32.totalorder %s28, 0
      %p69 = por %p67, %p68
      %s70 = ssub.s32 %s29, %s41
      %s71 = ssub.s32 %s30, %s37
      %s72 = sor.u32 %s70, %s71
      %p73 = scmp.eq.s32.totalorder %s72, 0
      %s75 = sadd.s32 %s74, 1
      %s76 = scalar_select %p73, %s74, %s75
      %p79 = pneg %p73
      %p80 = scmp.eq.s32.totalorder %s22, 1
      %p81 = por %p79, %p80
      %p82 = scmp.ne.s32.totalorder %s74, %s77
      %p83 = scmp.eq.s32.totalorder %s22, 0
      %p84 = por %p82, %p83
      %p85 = scmp.ne.s32.totalorder %s74, %s77
      %p86 = scmp.eq.s32.totalorder %s27, 1
      %p87 = por %p85, %p86
      %p88 = scmp.ne.s32.totalorder %s77, %s78
      %p89 = scmp.eq.s32.totalorder %s27, 0
      %p90 = por %p88, %p89
      %p91 = scmp.ne.s32.totalorder %s77, %s78
      %p92 = scmp.eq.s32.totalorder %s28, 1
      %p93 = por %p91, %p92
      %p95 = scmp.ne.s32.totalorder %s78, %s94
      %p96 = scmp.eq.s32.totalorder %s28, 0
      %p97 = por %p95, %p96
      %s99 = sadd.s32 %s98, 1
      %p102 = scmp.eq.s32.totalorder %s22, 1
      %p103 = scmp.ne.s32.totalorder %s98, %s100
      %p104 = scmp.eq.s32.totalorder %s22, 0
      %p105 = por %p103, %p104
      %p106 = scmp.ne.s32.totalorder %s98, %s100
      %p107 = scmp.eq.s32.totalorder %s27, 1
      %p108 = por %p106, %p107
      %p109 = scmp.ne.s32.totalorder %s100, %s101
      %p110 = scmp.eq.s32.totalorder %s27, 0
      %p111 = por %p109, %p110
      %p112 = scmp.ne.s32.totalorder %s100, %s101
      %p113 = scmp.eq.s32.totalorder %s28, 1
      %p114 = por %p112, %p113
      %p116 = scmp.ne.s32.totalorder %s101, %s115
      %p117 = scmp.eq.s32.totalorder %s28, 0
      %p118 = por %p116, %p117
      %s120 = sadd.s32 %s119, 1
      %p123 = scmp.eq.s32.totalorder %s22, 1
      %p124 = scmp.ne.s32.totalorder %s119, %s121
      %p125 = scmp.eq.s32.totalorder %s22, 0
      %p126 = por %p124, %p125
      %p127 = scmp.ne.s32.totalorder %s119, %s121
      %p128 = scmp.eq.s32.totalorder %s27, 1
      %p129 = por %p127, %p128
      %p130 = scmp.ne.s32.totalorder %s121, %s122
      %p131 = scmp.eq.s32.totalorder %s27, 0
      %p132 = por %p130, %p131
      %p133 = scmp.ne.s32.totalorder %s121, %s122
      %p134 = scmp.eq.s32.totalorder %s28, 1
      %p135 = por %p133, %p134
      %p137 = scmp.ne.s32.totalorder %s122, %s136
      %p138 = scmp.eq.s32.totalorder %s28, 0
      %p139 = por %p137, %p138
      %s141 = sadd.s32 %s140, 1
      %p144 = scmp.eq.s32.totalorder %s22, 1
      %p145 = scmp.ne.s32.totalorder %s140, %s142
      %p146 = scmp.eq.s32.totalorder %s22, 0
      %p147 = por %p145, %p146
      %p148 = scmp.ne.s32.totalorder %s140, %s142
      %p149 = scmp.eq.s32.totalorder %s27, 1
      %p150 = por %p148, %p149
      %p151 = scmp.ne.s32.totalorder %s142, %s143
      %p152 = scmp.eq.s32.totalorder %s27, 0
      %p153 = por %p151, %p152
      %p154 = scmp.ne.s32.totalorder %s142, %s143
      %p155 = scmp.eq.s32.totalorder %s28, 1
      %p156 = por %p154, %p155
      %p158 = scmp.ne.s32.totalorder %s143, %s157
      %p159 = scmp.eq.s32.totalorder %s28, 0
      %p160 = por %p158, %p159
      %s162 = sadd.s32 %s161, 1
      %p165 = scmp.eq.s32.totalorder %s22, 1
      %p166 = scmp.ne.s32.totalorder %s161, %s163
      %p167 = scmp.eq.s32.totalorder %s22, 0
      %p168 = por %p166, %p167
      %p169 = scmp.ne.s32.totalorder %s161, %s163
      %p170 = scmp.eq.s32.totalorder %s27, 1
      %p171 = por %p169, %p170
      %p172 = scmp.ne.s32.totalorder %s163, %s164
      %p173 = scmp.eq.s32.totalorder %s27, 0
      %p174 = por %p172, %p173
      %p175 = scmp.ne.s32.totalorder %s163, %s164
      %p176 = scmp.eq.s32.totalorder %s28, 1
      %p177 = por %p175, %p176
      %p179 = scmp.ne.s32.totalorder %s164, %s178
      %p180 = scmp.eq.s32.totalorder %s28, 0
      %p181 = por %p179, %p180
      %s182 = ssub.s32 %s29, %s41
      %s183 = ssub.s32 %s30, %s37
      %s184 = sor.u32 %s182, %s183
      %p185 = scmp.eq.s32.totalorder %s184, 0
      %s187 = sadd.s32 %s186, 1
      %s188 = scalar_select %p185, %s186, %s187
      %p191 = pneg %p185
      %p192 = scmp.eq.s32.totalorder %s22, 1
      %p193 = por %p191, %p192
      %p194 = scmp.ne.s32.totalorder %s186, %s189
      %p195 = scmp.eq.s32.totalorder %s22, 0
      %p196 = por %p194, %p195
      %p197 = scmp.ne.s32.totalorder %s186, %s189
      %p198 = scmp.eq.s32.totalorder %s27, 1
      %p199 = por %p197, %p198
      %p200 = scmp.ne.s32.totalorder %s189, %s190
      %p201 = scmp.eq.s32.totalorder %s27, 0
      %p202 = por %p200, %p201
      %p203 = scmp.ne.s32.totalorder %s189, %s190
      %p204 = scmp.eq.s32.totalorder %s28, 1
      %p205 = por %p203, %p204
      %p207 = scmp.ne.s32.totalorder %s190, %s206
      %p208 = scmp.eq.s32.totalorder %s28, 0
      %p209 = por %p207, %p208
      %p210 = scmp.le.s32.totalorder 1, %s22
      %p211 = scmp.lt.s32.totalorder %s22, 3
      %p212 = pnand %p210, %p211
      %p213 = pneg %p212
      // Predicated region
      $region9: #{tpu_custom_call.1} parent=5 // pred_check
        _
      $region10: #{tpu_custom_call.1} parent=5 // pred_check_branch
        %215 = sbr.rel (%p212) target = $region12
      $region11: #{tpu_custom_call.1} parent=5 // pred_region
        %s216 = ssub.s32 %s22, 1
        // Predicated region
        $region13: #{tpu_custom_call.1} parent=11 // pred_check
          %p217 = pneg %p111
        $region14: #{tpu_custom_call.1} parent=11 // pred_check_branch
          %219 = sbr.rel (%p217) target = $region16
        $region15: #{tpu_custom_call.1} parent=11 // pred_region
          %s221 = ssub.s32 128, 128
          %222 = vsyncadd [#allocation6], %s221
          %s223 = sshll.u32 [#allocation7], 4
          %s224 = int_to_ptr.vmem [resolvable:$true] %s223
          %229 = dma.hbm_to_vmem [thread:$0]  %s2, 128, %s224, [#allocation6], 64, 64, 4
        $region16: #{tpu_custom_call.1} parent=11 // pred_fallthru
          _
        // Predicated region
        $region17: #{tpu_custom_call.1} parent=11 // pred_check
          %p230 = pneg %p132
        $region18: #{tpu_custom_call.1} parent=11 // pred_check_branch
          %232 = sbr.rel (%p230) target = $region20
        $region19: #{tpu_custom_call.1} parent=11 // pred_region
          _
        $region20: #{tpu_custom_call.1} parent=11 // pred_fallthru
          _
        // Predicated region
        $region21: #{tpu_custom_call.1} parent=11 // pred_check
          %p233 = pneg %p153
        $region22: #{tpu_custom_call.1} parent=11 // pred_check_branch
          %235 = sbr.rel (%p233) target = $region24
        $region23: #{tpu_custom_call.1} parent=11 // pred_region
          %s237 = ssub.s32 1024, 1024
          %238 = vsyncadd [#allocation9], %s237
          %s239 = sshll.u32 [#allocation8], 4
          %s240 = int_to_ptr.vmem [resolvable:$true] %s239
          %245 = dma.hbm_to_vmem [thread:$0]  %s4, 1024, %s240, [#allocation9], 64, 64, 4
        $region24: #{tpu_custom_call.1} parent=11 // pred_fallthru
          _
        // Predicated region
        $region25: #{tpu_custom_call.1} parent=11 // pred_check
          %p246 = pneg %p174
        $region26: #{tpu_custom_call.1} parent=11 // pred_check_branch
          %248 = sbr.rel (%p246) target = $region28
        $region27: #{tpu_custom_call.1} parent=11 // pred_region
          _
        $region28: #{tpu_custom_call.1} parent=11 // pred_fallthru
          _
      $region12: #{tpu_custom_call.1} parent=5 // pred_fallthru
        _
      %p249 = scmp.lt.s32.totalorder %s22, 2
      // Predicated region
      $region29: #{tpu_custom_call.1} parent=5 // pred_check
        %p250 = pneg %p249
      $region30: #{tpu_custom_call.1} parent=5 // pred_check_branch
        %252 = sbr.rel (%p250) target = $region32
      $region31: #{tpu_custom_call.1} parent=5 // pred_region
        // Predicated region
        $region33: #{tpu_custom_call.1} parent=31 // pred_check
          %p253 = pneg %p56
        $region34: #{tpu_custom_call.1} parent=31 // pred_check_branch
          %255 = sbr.rel (%p253) target = $region36
        $region35: #{tpu_custom_call.1} parent=31 // pred_region
          %s256 = sand.u32 %s46, 1
          %s257 = scalar_lea.sflag [#allocation3], %s256
          %s258 = sand.u32 %s46, 1
          %s259 = smul.addr %s258, 4
          %s260 = scalar_lea.vmem [#allocation2], %s259
          %s262 = ssub.s32 64, 64
          %263 = vsyncadd %s257, %s262
          %s264 = sadd.s32 %s30, %s29
          %s265 = smul.addr %s264, 64
          %s266 = scalar_lea.hbm %s0, %s265
          %s268 = sshll.u32 %s260, 4
          %s269 = int_to_ptr.vmem [resolvable:$true] %s268
          %271 = dma.hbm_to_vmem [thread:$0]  %s266, 64, %s269, %s257
        $region36: #{tpu_custom_call.1} parent=31 // pred_fallthru
          _
        // Predicated region
        $region37: #{tpu_custom_call.1} parent=31 // pred_check
          %p272 = pneg %p84
        $region38: #{tpu_custom_call.1} parent=31 // pred_check_branch
          %274 = sbr.rel (%p272) target = $region40
        $region39: #{tpu_custom_call.1} parent=31 // pred_region
          %s275 = sand.u32 %s22, 1
          %s276 = scalar_lea.sflag [#allocation6], %s275
          %s277 = sand.u32 %s74, 1
          %s278 = smul.addr %s277, 4
          %s279 = scalar_lea.vmem [#allocation5], %s278
          %s281 = ssub.s32 64, 64
          %282 = vsyncadd %s276, %s281
          %s283 = sadd.s32 %s30, %s29
          %s284 = smul.addr %s283, 64
          %s285 = scalar_lea.hbm %s1, %s284
          %s287 = sshll.u32 %s279, 4
          %s288 = int_to_ptr.vmem [resolvable:$true] %s287
          %290 = dma.hbm_to_vmem [thread:$0]  %s285, 64, %s288, %s276
        $region40: #{tpu_custom_call.1} parent=31 // pred_fallthru
          _
      $region32: #{tpu_custom_call.1} parent=5 // pred_fallthru
        _
      %p291 = scmp.le.s32.totalorder 1, %s22
      %p292 = scmp.lt.s32.totalorder %s22, 3
      %p293 = pnand %p291, %p292
      %p294 = pneg %p293
      // Predicated region
      $region41: #{tpu_custom_call.1} parent=5 // pred_check
        _
      $region42: #{tpu_custom_call.1} parent=5 // pred_check_branch
        %296 = sbr.rel (%p293) target = $region44
      $region43: #{tpu_custom_call.1} parent=5 // pred_region
        %s297 = ssub.s32 %s22, 1
        %s298 = sand.u32 %s49, 1
        %s299 = scalar_lea.sflag [#allocation3], %s298
        %s300 = sand.u32 %s49, 1
        %s301 = smul.addr %s300, 4
        %s302 = scalar_lea.vmem [#allocation2], %s301
        // Predicated region
        $region45: #{tpu_custom_call.1} parent=43 // pred_check
          %p303 = pneg %p62
        $region46: #{tpu_custom_call.1} parent=43 // pred_check_branch
          %305 = sbr.rel (%p303) target = $region48
        $region47: #{tpu_custom_call.1} parent=43 // pred_region
          %306 = dma.done %s299, 64
        $region48: #{tpu_custom_call.1} parent=43 // pred_fallthru
          _
        %s307 = sand.u32 %s27, 1
        %s308 = scalar_lea.sflag [#allocation6], %s307
        %s309 = sand.u32 %s77, 1
        %s310 = smul.addr %s309, 4
        %s311 = scalar_lea.vmem [#allocation5], %s310
        // Predicated region
        $region49: #{tpu_custom_call.1} parent=43 // pred_check
          %p312 = pneg %p90
        $region50: #{tpu_custom_call.1} parent=43 // pred_check_branch
          %314 = sbr.rel (%p312) target = $region52
        $region51: #{tpu_custom_call.1} parent=43 // pred_region
          %315 = dma.done %s308, 64
        $region52: #{tpu_custom_call.1} parent=43 // pred_fallthru
          _
        // Predicated region
        $region53: #{tpu_custom_call.1} parent=43 // pred_check
          %p316 = pneg %p111
        $region54: #{tpu_custom_call.1} parent=43 // pred_check_branch
          %318 = sbr.rel (%p316) target = $region56
        $region55: #{tpu_custom_call.1} parent=43 // pred_region
          %319 = dma.done [#allocation6], 128
        $region56: #{tpu_custom_call.1} parent=43 // pred_fallthru
          _
        // Predicated region
        $region57: #{tpu_custom_call.1} parent=43 // pred_check
          %p320 = pneg %p153
        $region58: #{tpu_custom_call.1} parent=43 // pred_check_branch
          %322 = sbr.rel (%p320) target = $region60
        $region59: #{tpu_custom_call.1} parent=43 // pred_region
          %323 = dma.done [#allocation9], 1024
        $region60: #{tpu_custom_call.1} parent=43 // pred_fallthru
          _
        %s324 = sand.u32 %s49, 1
        %s325 = scalar_lea.sflag [#allocation3], %s324
        %s326 = sand.u32 %s49, 1
        %s327 = smul.addr %s326, 4
        %s328 = scalar_lea.vmem [#allocation2], %s327
        %p329 = pneg %p62
        %p330 = pneg %p59
        %s331 = sand.u32 %s27, 1
        %s332 = scalar_lea.sflag [#allocation6], %s331
        %s333 = sand.u32 %s77, 1
        %s334 = smul.addr %s333, 4
        %s335 = scalar_lea.vmem [#allocation5], %s334
        %p336 = pneg %p90
        %p337 = pneg %p87
        %p338 = pneg %p111
        %p339 = pneg %p108
        %p340 = pneg %p132
        %p341 = pneg %p129
        %p342 = pneg %p153
        %p343 = pneg %p150
        %p344 = pneg %p174
        %p345 = pneg %p171
        %p346 = pneg %p202
        %p347 = pneg %p199
        %s348 = sand.u32 %s189, 1
        %s349 = scalar_lea.sflag [#allocation4], %s348
        %s350 = sand.u32 %s189, 1
        %s351 = smul.addr %s350, 8
        %s352 = scalar_lea.vmem [#allocation10], %s351
        %v354 = vld [vmem:[%s302] sm:$0xf]
        %v355 = vld [vmem:[#allocation7] sm:$0xf]
        %v356 = vld [vmem:[%s311] sm:$0xf]
        %v357 = vld [vmem:[#allocation7 + $0x4] sm:$0xf]
        %vm358 = vcmask 64512
        %v360 = vsel %vm358, %v356, 0
        %vm362 = vcmask 1043456
        %v364 = vsel %vm362, %v357, 0
        %366 = vmatprep.subr.bf16.mxu0 0
        %367 = vmatpush1.bf16.msra.mxu0 %v364
        %368 = vmatprep.subr.bf16.mxu0 0
        %369 = vmatpush1.bf16.msra.mxu0 0
        %370 = vmatprep.subr.bf16.mxu0 0
        %371 = vmatpush1.bf16.msra.mxu0 0
        %372 = vmatprep.subr.bf16.mxu0 0
        %373 = vmatpush1.bf16.msra.mxu0 0
        %374 = vmatprep.subr.bf16.mxu0 0
        %375 = vmatpush1.bf16.msra.mxu0 0
        %376 = vmatprep.subr.bf16.mxu0 0
        %377 = vmatpush1.bf16.msra.mxu0 0
        %378 = vmatprep.subr.bf16.mxu0 0
        %379 = vmatpush1.bf16.msra.mxu0 0
        %380 = vmatprep.subr.bf16.mxu0 0
        %381 = vmatpush1.bf16.msra.mxu0 0
        %382 = vmatprep.subr.bf16.mxu0 0
        %383 = vmatpush1.bf16.msra.mxu0 0
        %384 = vmatprep.subr.bf16.mxu0 0
        %385 = vmatpush1.bf16.msra.mxu0 0
        %386 = vmatprep.subr.bf16.mxu0 0
        %387 = vmatpush1.bf16.msra.mxu0 0
        %388 = vmatprep.subr.bf16.mxu0 0
        %389 = vmatpush1.bf16.msra.mxu0 0
        %390 = vmatprep.subr.bf16.mxu0 0
        %391 = vmatpush1.bf16.msra.mxu0 0
        %392 = vmatprep.subr.bf16.mxu0 0
        %393 = vmatpush1.bf16.msra.mxu0 0
        %394 = vmatprep.subr.bf16.mxu0 0
        %395 = vmatpush1.bf16.msra.mxu0 0
        %396 = vmatprep.subr.bf16.mxu0 0
        %397 = vmatpush1.bf16.msra.mxu0 0
        %398 = vmatprep.mubr.bf16.mxu0 0
        %399 = vmatmul.mubr.bf16.gmra.mrb[0].mxu0 %v360
        %v400 = vpop.f32.mrb[0].mxu0
        %v401 = vadd.f32 0.0, %v400
        %v402 = vpop.f32.mrb[0].mxu0
        %v403 = vpop.f32.mrb[0].mxu0
        %v404 = vpop.f32.mrb[0].mxu0
        %405 = vdwg.mxu0
        %v407 = vsel %vm358, %v354, 0
        %v410 = vsel %vm362, %v355, 0
        %412 = vmatprep.subr.bf16.mxu0 0
        %413 = vmatpush1.bf16.msra.mxu0 %v410
        %414 = vmatprep.subr.bf16.mxu0 0
        %415 = vmatpush1.bf16.msra.mxu0 0
        %416 = vmatprep.subr.bf16.mxu0 0
        %417 = vmatpush1.bf16.msra.mxu0 0
        %418 = vmatprep.subr.bf16.mxu0 0
        %419 = vmatpush1.bf16.msra.mxu0 0
        %420 = vmatprep.subr.bf16.mxu0 0
        %421 = vmatpush1.bf16.msra.mxu0 0
        %422 = vmatprep.subr.bf16.mxu0 0
        %423 = vmatpush1.bf16.msra.mxu0 0
        %424 = vmatprep.subr.bf16.mxu0 0
        %425 = vmatpush1.bf16.msra.mxu0 0
        %426 = vmatprep.subr.bf16.mxu0 0
        %427 = vmatpush1.bf16.msra.mxu0 0
        %428 = vmatprep.subr.bf16.mxu0 0
        %429 = vmatpush1.bf16.msra.mxu0 0
        %430 = vmatprep.subr.bf16.mxu0 0
        %431 = vmatpush1.bf16.msra.mxu0 0
        %432 = vmatprep.subr.bf16.mxu0 0
        %433 = vmatpush1.bf16.msra.mxu0 0
        %434 = vmatprep.subr.bf16.mxu0 0
        %435 = vmatpush1.bf16.msra.mxu0 0
        %436 = vmatprep.subr.bf16.mxu0 0
        %437 = vmatpush1.bf16.msra.mxu0 0
        %438 = vmatprep.subr.bf16.mxu0 0
        %439 = vmatpush1.bf16.msra.mxu0 0
        %440 = vmatprep.subr.bf16.mxu0 0
        %441 = vmatpush1.bf16.msra.mxu0 0
        %442 = vmatprep.subr.bf16.mxu0 0
        %443 = vmatpush1.bf16.msra.mxu0 0
        %444 = vmatprep.mubr.bf16.mxu0 0
        %445 = vmatmul.mubr.bf16.gmra.mrb[0].mxu0 %v407
        %v446 = vpop.f32.mrb[0].mxu0
        %v447 = vadd.f32 %v401, %v446
        %v448 = vpop.f32.mrb[0].mxu0
        %v449 = vpop.f32.mrb[0].mxu0
        %v450 = vpop.f32.mrb[0].mxu0
        %451 = vdwg.mxu0
        %v452 = vld [vmem:[%s3] sm:$0x1]
        %v454 = vlaneseq
        %v455 = vshrl.u32 %v454, 7
        %v456 = vsub.s32 0, %v455
        %v457 = vrot.slane %v452, %v456
        %v459 = vadd.f32 %v447, %v457
        %v460 = vmax.f32 %v459, 0.0
        %v461 = vpack.c.bf16 %v460, %v460
        %v462 = vld [vmem:[#allocation8] sm:$0xf]
        %v463 = vld [vmem:[#allocation8 + $0x4] sm:$0xf]
        %v464 = vld [vmem:[#allocation8 + $0x8] sm:$0xf]
        %v465 = vld [vmem:[#allocation8 + $0xc] sm:$0xf]
        %v466 = vld [vmem:[#allocation8 + $0x10] sm:$0xf]
        %v467 = vld [vmem:[#allocation8 + $0x14] sm:$0xf]
        %v468 = vld [vmem:[#allocation8 + $0x18] sm:$0xf]
        %v469 = vld [vmem:[#allocation8 + $0x1c] sm:$0xf]
        %v470 = vld [vmem:[#allocation8 + $0x20] sm:$0xf]
        %v471 = vld [vmem:[#allocation8 + $0x24] sm:$0xf]
        %v472 = vld [vmem:[#allocation8 + $0x28] sm:$0xf]
        %v473 = vld [vmem:[#allocation8 + $0x2c] sm:$0xf]
        %v474 = vld [vmem:[#allocation8 + $0x30] sm:$0xf]
        %v475 = vld [vmem:[#allocation8 + $0x34] sm:$0xf]
        %v476 = vld [vmem:[#allocation8 + $0x38] sm:$0xf]
        %v477 = vld [vmem:[#allocation8 + $0x3c] sm:$0xf]
        %v478 = vld [vmem:[%s5] sm:$0x1]
        %v480 = vlaneseq
        %v481 = vshrl.u32 %v480, 7
        %v482 = vsub.s32 0, %v481
        %v483 = vrot.slane %v478, %v482
        %v501 = vunpack.c.l.b16 %v462
        %v502 = vunpack.c.l.b16 %v463
        %v503 = vunpack.c.l.b16 %v464
        %v504 = vunpack.c.l.b16 %v465
        %v505 = vunpack.c.l.b16 %v466
        %v506 = vunpack.c.l.b16 %v467
        %v507 = vunpack.c.l.b16 %v468
        %v508 = vunpack.c.l.b16 %v469
        %v509 = vunpack.c.l.b16 %v470
        %v510 = vunpack.c.l.b16 %v471
        %v511 = vunpack.c.l.b16 %v472
        %v512 = vunpack.c.l.b16 %v473
        %v513 = vunpack.c.l.b16 %v474
        %v514 = vunpack.c.l.b16 %v475
        %v515 = vunpack.c.l.b16 %v476
        %v516 = vunpack.c.l.b16 %v477
        %v517 = vpack.c.b16 %v502, %v501
        %v518 = vpack.c.b16 %v504, %v503
        %v519 = vpack.c.b16 %v506, %v505
        %v520 = vpack.c.b16 %v508, %v507
        %v521 = vpack.c.b16 %v510, %v509
        %v522 = vpack.c.b16 %v512, %v511
        %v523 = vpack.c.b16 %v514, %v513
        %v524 = vpack.c.b16 %v516, %v515
        %533 = vmatprep.subr.bf16.mxu0 0
        %534 = vmatpush1.bf16.msra.mxu0 %v517
        %535 = vmatprep.subr.bf16.mxu0 0
        %536 = vmatpush1.bf16.msra.mxu0 %v518
        %537 = vmatprep.subr.bf16.mxu0 0
        %538 = vmatpush1.bf16.msra.mxu0 %v519
        %539 = vmatprep.subr.bf16.mxu0 0
        %540 = vmatpush1.bf16.msra.mxu0 %v520
        %541 = vmatprep.subr.bf16.mxu0 0
        %542 = vmatpush1.bf16.msra.mxu0 %v521
        %543 = vmatprep.subr.bf16.mxu0 0
        %544 = vmatpush1.bf16.msra.mxu0 %v522
        %545 = vmatprep.subr.bf16.mxu0 0
        %546 = vmatpush1.bf16.msra.mxu0 %v523
        %547 = vmatprep.subr.bf16.mxu0 0
        %548 = vmatpush1.bf16.msra.mxu0 %v524
        %549 = vmatprep.subr.bf16.mxu0 0
        %550 = vmatpush1.bf16.msra.mxu0 0
        %551 = vmatprep.subr.bf16.mxu0 0
        %552 = vmatpush1.bf16.msra.mxu0 0
        %553 = vmatprep.subr.bf16.mxu0 0
        %554 = vmatpush1.bf16.msra.mxu0 0
        %555 = vmatprep.subr.bf16.mxu0 0
        %556 = vmatpush1.bf16.msra.mxu0 0
        %557 = vmatprep.subr.bf16.mxu0 0
        %558 = vmatpush1.bf16.msra.mxu0 0
        %559 = vmatprep.subr.bf16.mxu0 0
        %560 = vmatpush1.bf16.msra.mxu0 0
        %561 = vmatprep.subr.bf16.mxu0 0
        %562 = vmatpush1.bf16.msra.mxu0 0
        %563 = vmatprep.subr.bf16.mxu0 0
        %564 = vmatpush1.bf16.msra.mxu0 0
        %565 = vmatprep.mubr.bf16.mxu0 0
        %566 = vmatmul.mubr.bf16.gmra.mrb[0].mxu0 %v461
        %v567 = vpop.f32.mrb[0].mxu0
        %v568 = vadd.f32 %v483, %v567
        %v569 = vpop.f32.mrb[0].mxu0
        %v570 = vpop.f32.mrb[0].mxu0
        %v571 = vpop.f32.mrb[0].mxu0
        %572 = vdwg.mxu0
        %573 = vst [vmem:[%s352] sm:$0xff] %v568
        %s574 = sand.u32 %s189, 1
        %s575 = scalar_lea.sflag [#allocation4], %s574
        %s576 = sand.u32 %s189, 1
        %s577 = smul.addr %s576, 8
        %s578 = scalar_lea.vmem [#allocation10], %s577
        // Predicated region
        $region61: #{tpu_custom_call.1} parent=43 // pred_check
          %p579 = pneg %p199
        $region62: #{tpu_custom_call.1} parent=43 // pred_check_branch
          %581 = sbr.rel (%p579) target = $region64
        $region63: #{tpu_custom_call.1} parent=43 // pred_region
          %s583 = ssub.s32 128, 128
          %584 = vsyncadd %s575, %s583
          %s585 = sadd.s32 %s32, %s31
          %s586 = smul.addr %s585, 128
          %s587 = scalar_lea.hbm %s6, %s586
          %s589 = sshll.u32 %s578, 4
          %s590 = int_to_ptr.vmem [resolvable:$true] %s589
          %592 = dma.vmem_to_hbm [thread:$0]  %s590, 128, %s587, %s575
        $region64: #{tpu_custom_call.1} parent=43 // pred_fallthru
          _
      $region44: #{tpu_custom_call.1} parent=5 // pred_fallthru
        _
      %p593 = scmp.le.s32.totalorder 2, %s22
      // Predicated region
      $region65: #{tpu_custom_call.1} parent=5 // pred_check
        %p594 = pneg %p593
      $region66: #{tpu_custom_call.1} parent=5 // pred_check_branch
        %596 = sbr.rel (%p594) target = $region68
      $region67: #{tpu_custom_call.1} parent=5 // pred_region
        %s597 = ssub.s32 %s22, 2
        // Predicated region
        $region69: #{tpu_custom_call.1} parent=67 // pred_check
          %p598 = pneg %p205
        $region70: #{tpu_custom_call.1} parent=67 // pred_check_branch
          %600 = sbr.rel (%p598) target = $region72
        $region71: #{tpu_custom_call.1} parent=67 // pred_region
          %s601 = sand.u32 %s190, 1
          %s602 = scalar_lea.sflag [#allocation4], %s601
          %s603 = sand.u32 %s190, 1
          %s604 = smul.addr %s603, 8
          %s605 = scalar_lea.vmem [#allocation10], %s604
          %606 = dma.done %s602, 128
        $region72: #{tpu_custom_call.1} parent=67 // pred_fallthru
          _
      $region68: #{tpu_custom_call.1} parent=5 // pred_fallthru
        _
    $region6: #{tpu_custom_call.1} parent=1 // loop_footer
      %s26 = sadd.s32 1, %s22
    $region7: #{tpu_custom_call.1} parent=1 // loop_footer_branch
      %21 = sbr.rel target = $region3
    $region8: #{tpu_custom_call.1} parent=1 // loop_exit
      _
    %607 = vsyncpa [#allocation3], 1
    %s608 = scalar_lea.sflag [#allocation3], 1
    %609 = vsyncpa %s608, 1
    %610 = vsyncpa [#allocation6], 1
    %s611 = scalar_lea.sflag [#allocation6], 1
    %612 = vsyncpa %s611, 1
    %613 = vsyncpa [#allocation9], 1
    %614 = vsyncpa [#allocation4], 1
    %s615 = scalar_lea.sflag [#allocation4], 1
    %616 = vsyncpa %s615, 1

</llo_original>
